<compile_context>
chip_gen: v7x
topology: tpu7x:2x2x1
jax: 0.10.0
libtpu: 0.0.40
codegen_flags: <defaults>
</compile_context>

<pallas_src>
import functools

import jax
import jax.numpy as jnp
import numpy as np
from jax.experimental import pallas as pl
from jax.experimental.pallas import tpu as pltpu


# ----------------------------- JAX glue: grouping -----------------------------
def square_distance(src, dst):
    # matches the PyTorch formula exactly
    dist = -2.0 * jnp.einsum("bnc,bmc->bnm", src, dst)
    dist = dist + jnp.sum(src**2, -1)[:, :, None]
    dist = dist + jnp.sum(dst**2, -1)[:, None, :]
    return dist


def query_ball_point(radius, nsample, xyz, new_xyz):
    B, N, _ = xyz.shape
    sqrdists = square_distance(new_xyz, xyz)                    # (B, S, N)
    base = jnp.arange(N, dtype=jnp.int32)[None, None, :]
    group_idx = jnp.where(sqrdists > radius**2, N, base)        # out-of-range -> N
    group_idx = jnp.sort(group_idx, axis=-1)[:, :, :nsample]    # (B, S, K)
    group_first = group_idx[:, :, :1]
    group_idx = jnp.where(group_idx == N, group_first, group_idx)
    return group_idx


def index_points(points, idx):
    # points (B, N, C), idx (B, ...) -> (B, ..., C)
    B = points.shape[0]
    return points[jnp.arange(B)[:, None, None], idx]


def group_k_major(radius, nsample, xyz, points):
    """Ball-query grouping, neighbour-major: (B, K, N, 3+C).

    Same values as the PyTorch group() (which is (B, N, K, 3+C)) with the
    nsample axis leading, so the Pallas kernel slices one neighbour at a time
    as a natural (TN, 3+C) sublane x lane tile (no sublane relayouts).
    """
    idx = query_ball_point(radius, nsample, xyz, xyz)           # (B, N, K)
    idx = jnp.swapaxes(idx, 1, 2)                               # (B, K, N)
    grouped_xyz = index_points(xyz, idx)                        # (B, K, N, 3)
    grouped_xyz_norm = grouped_xyz - xyz[:, None, :, :]
    grouped_points = index_points(points, idx)                  # (B, K, N, C)
    return jnp.concatenate([grouped_xyz_norm, grouped_points], axis=-1)


def group(radius, nsample, xyz, points):
    # PyTorch-layout (B, N, K, 3+C) version, used only by the reference check.
    idx = query_ball_point(radius, nsample, xyz, xyz)
    grouped_xyz = index_points(xyz, idx)
    grouped_xyz_norm = grouped_xyz - xyz[:, :, None, :]
    grouped_points = index_points(points, idx)
    return jnp.concatenate([grouped_xyz_norm, grouped_points], axis=-1)


# ------------------------------- Pallas kernel --------------------------------
def _invres_kernel(g_ref, ident_ref, w1_ref, b1_ref, w2_ref, b2_ref,
                   w3_ref, b3_ref, o_ref):
    """One (batch, N-tile) block.

    g_ref     : (1, K, TN, 3+C)  mm_dtype   grouped neighbourhood features
    ident_ref : (1, TN, C)       f32        residual input
    o_ref     : (1, TN, C)       f32
    weights   : bf16 (or f32); biases f32
    """
    K = g_ref.shape[1]
    w1 = w1_ref[...]                                            # load once

    # LocalAggregation: Linear(3+C -> C) + ReLU, then max over neighbours.
    # Running max over K keeps the live activation at (TN, C) instead of
    # (TN*K, C); bias add + ReLU hoisted out of the K loop (exact: ReLU is
    # monotone and the bias is shared across neighbours).
    acc = jnp.dot(g_ref[0, 0], w1, preferred_element_type=jnp.float32)
    for k in range(1, K):                                       # static unroll
        acc = jnp.maximum(
            acc, jnp.dot(g_ref[0, k], w1, preferred_element_type=jnp.float32))
    h = jnp.maximum(acc + b1_ref[...], 0.0)                     # (TN, C) f32

    # pwconv[0]: Linear(C -> mid) + ReLU
    h2 = jnp.dot(h.astype(w2_ref.dtype), w2_ref[...],
                 preferred_element_type=jnp.float32) + b2_ref[...]
    h2 = jnp.maximum(h2, 0.0)
    # pwconv[1]: Linear(mid -> C), no act
    h3 = jnp.dot(h2.astype(w3_ref.dtype), w3_ref[...],
                 preferred_element_type=jnp.float32) + b3_ref[...]
    # residual + final ReLU
    o_ref[0] = jnp.maximum(h3 + ident_ref[0], 0.0).astype(o_ref.dtype)


def _pick_tile_n(n, target):
    """Largest N-tile <= target that divides N and is sublane-aligned (x8)."""
    if n <= target:
        return n
    for t in range(target, 7, -1):
        if t % 8 == 0 and n % t == 0:
            return t
    return n


def _vmem_limit_bytes(tn, k, c3, c, cm, mm_dtype):
    esz = jnp.dtype(mm_dtype).itemsize
    grouped_blk = tn * k * c3 * esz            # double-buffered by the pipeline
    io_blk = tn * c * 4                        # ident + out, double-buffered
    weights = (c3 * c + c * cm + cm * c) * esz + (2 * c + cm) * 4
    live_act = 6 * tn * max(c, cm) * 4         # in-flight f32 activations
    est = 2 * grouped_blk + 4 * io_blk + 2 * weights + live_act
    # >= 32 MiB (v5e default scoped limit is only 16 MiB),
    # <= 64 MiB (v7x physical VMEM per TensorCore).
    return int(min(max(est + (8 << 20), 32 << 20), 64 << 20))


def invres_mlp_forward(position, feature, params, *, radius, nsample,
                       tile_n=512, use_bf16=True):
    """Forward pass of InvResMlp. Returns [position, new_feature]."""
    B, N, C = feature.shape
    w1, b1, w2, b2, w3, b3 = (params[k] for k in ("w1", "b1", "w2", "b2", "w3", "b3"))
    C3 = w1.shape[0]
    Cm = w2.shape[1]

    # Feed the MXU in bf16 (halves HBM traffic on the dominant grouped read);
    # biases / residual / elementwise math stay f32.
    mm_dtype = jnp.bfloat16 if use_bf16 else jnp.float32

    # TODO(synk): ball query + neighbour gather remain plain JAX; fusing the
    # gather into the kernel (scalar-prefetched indices + manual DMA gather)
    # would remove the K-expanded HBM round trip entirely.
    grouped = group_k_major(radius, nsample, position, feature)  # (B, K, N, C3)
    K = grouped.shape[1]
    grouped = grouped.astype(mm_dtype)
    w1 = w1.astype(mm_dtype)
    w2 = w2.astype(mm_dtype)
    w3 = w3.astype(mm_dtype)

    # Tile over N as well as B so VMEM use is independent of problem size and
    # the (B, N//TN) grid gives the pipeline enough steps to hide DMA.
    TN = _pick_tile_n(N, tile_n)
    grid = (B, N // TN)

    new_feature = pl.pallas_call(
        _invres_kernel,
        out_shape=jax.ShapeDtypeStruct((B, N, C), jnp.float32),
        grid=grid,
        in_specs=[
            pl.BlockSpec((1, K, TN, C3), lambda b, n: (b, 0, n, 0)),
            pl.BlockSpec((1, TN, C), lambda b, n: (b, n, 0)),
            pl.BlockSpec((C3, C), lambda b, n: (0, 0)),
            pl.BlockSpec((1, C), lambda b, n: (0, 0)),
            pl.BlockSpec((C, Cm), lambda b, n: (0, 0)),
            pl.BlockSpec((1, Cm), lambda b, n: (0, 0)),
            pl.BlockSpec((Cm, C), lambda b, n: (0, 0)),
            pl.BlockSpec((1, C), lambda b, n: (0, 0)),
        ],
        out_specs=pl.BlockSpec((1, TN, C), lambda b, n: (b, n, 0)),
        compiler_params=pltpu.CompilerParams(
            dimension_semantics=("parallel", "parallel"),
            vmem_limit_bytes=_vmem_limit_bytes(TN, K, C3, C, Cm, mm_dtype)),
    )(grouped, feature, w1, b1, w2, b2, w3, b3)

    return [position, new_feature]


# ------------------------- plain-JAX reference (check) ------------------------
def _reference(position, feature, params, *, radius, nsample, use_bf16=True):
    dt = jnp.bfloat16 if use_bf16 else jnp.float32
    grouped = group(radius, nsample, position, feature)          # (B, N, K, 3+C)
    w1 = params["w1"].astype(dt)
    w2 = params["w2"].astype(dt)
    w3 = params["w3"].astype(dt)
    h = jnp.einsum("bnkc,cd->bnkd", grouped.astype(dt), w1,
                   preferred_element_type=jnp.float32)
    h = jnp.maximum(h + params["b1"], 0.0)                       # bias + ReLU
    h = h.max(axis=2)                                            # max over K
    h = jnp.einsum("bnc,cd->bnd", h.astype(dt), w2,
                   preferred_element_type=jnp.float32) + params["b2"]
    h = jnp.maximum(h, 0.0)
    h = jnp.einsum("bnc,cd->bnd", h.astype(dt), w3,
                   preferred_element_type=jnp.float32) + params["b3"]
    h = h + feature
    return jnp.maximum(h, 0.0)


# ------------------------------------ main -------------------------------------
def _init_linear(key, fan_in, fan_out):
    # deterministic, PyTorch-Linear-like uniform(-1/sqrt(fan_in), 1/sqrt(fan_in))
    kw, kb = jax.random.split(key)
    bound = 1.0 / np.sqrt(fan_in)
    w = jax.random.uniform(kw, (fan_in, fan_out), jnp.float32, -bound, bound)
    b = jax.random.uniform(kb, (1, fan_out), jnp.float32, -bound, bound)
    return w, b


if __name__ == "__main__":
    # small shapes consistent with the module
    B, N, C = 2, 32, 16          # batch, points, in_channels
    expansion = 4
    Cm = C * expansion           # mid_channels
    radius, nsample = 0.4, 8

    key = jax.random.PRNGKey(0)
    kpos, kfeat, k1, k2, k3 = jax.random.split(key, 5)

    position = jax.random.uniform(kpos, (B, N, 3), jnp.float32)
    feature = jax.random.normal(kfeat, (B, N, C), jnp.float32)

    w1, b1 = _init_linear(k1, C + 3, C)    # LocalAggregation conv
    w2, b2 = _init_linear(k2, C, Cm)       # pwconv[0]
    w3, b3 = _init_linear(k3, Cm, C)       # pwconv[1]
    params = dict(w1=w1, b1=b1, w2=w2, b2=b2, w3=w3, b3=b3)

    fwd = jax.jit(functools.partial(invres_mlp_forward,
                                    radius=radius, nsample=nsample))
    pos_out, feat_out = fwd(position, feature, params)
    jax.block_until_ready(feat_out)

    ref = _reference(position, feature, params, radius=radius, nsample=nsample)
    np.testing.assert_allclose(np.asarray(feat_out), np.asarray(ref),
                               rtol=2e-3, atol=2e-3)
    assert pos_out.shape == (B, N, 3) and feat_out.shape == (B, N, C)

    print("KERNEL_OK")
</pallas_src>

<mosaic_0001>
module attributes {stable_mosaic.version = 11 : i64} {
  func.func @_invres_kernel(%arg0: i32, %arg1: i32, %arg2: memref<1x8x32x19xbf16, #tpu.memory_space<vmem>>, %arg3: memref<1x32x16xf32, #tpu.memory_space<vmem>>, %arg4: memref<19x16xbf16, #tpu.memory_space<vmem>>, %arg5: memref<1x16xf32, #tpu.memory_space<vmem>>, %arg6: memref<16x64xbf16, #tpu.memory_space<vmem>>, %arg7: memref<1x64xf32, #tpu.memory_space<vmem>>, %arg8: memref<64x16xbf16, #tpu.memory_space<vmem>>, %arg9: memref<1x16xf32, #tpu.memory_space<vmem>>, %arg10: memref<1x32x16xf32, #tpu.memory_space<vmem>>) attributes {dimension_semantics = [#tpu.dimension_semantics<parallel>, #tpu.dimension_semantics<parallel>], iteration_bounds = array<i64: 2, 1>, scalar_prefetch = 0 : i64, scratch_operands = 0 : i64, tpu.core_type = #tpu.core_type<tc>, window_params = [{transform_indices = @transform_0, window_bounds = array<i64: 1, 8, 32, 19>}, {transform_indices = @transform_1, window_bounds = array<i64: 1, 32, 16>}, {pipeline_mode = #tpu.pipeline_mode<synchronous>, transform_indices = @transform_2, window_bounds = array<i64: 19, 16>}, {pipeline_mode = #tpu.pipeline_mode<synchronous>, transform_indices = @transform_3, window_bounds = array<i64: 1, 16>}, {pipeline_mode = #tpu.pipeline_mode<synchronous>, transform_indices = @transform_4, window_bounds = array<i64: 16, 64>}, {pipeline_mode = #tpu.pipeline_mode<synchronous>, transform_indices = @transform_5, window_bounds = array<i64: 1, 64>}, {pipeline_mode = #tpu.pipeline_mode<synchronous>, transform_indices = @transform_6, window_bounds = array<i64: 64, 16>}, {pipeline_mode = #tpu.pipeline_mode<synchronous>, transform_indices = @transform_7, window_bounds = array<i64: 1, 16>}, {transform_indices = @transform_8, window_bounds = array<i64: 1, 32, 16>}]} {
    %c0 = arith.constant 0 : index
    %c0_0 = arith.constant 0 : index
    %0 = vector.load %arg4[%c0, %c0_0] : memref<19x16xbf16, #tpu.memory_space<vmem>>, vector<19x16xbf16>
    %c0_1 = arith.constant 0 : index
    %c0_2 = arith.constant 0 : index
    %c0_3 = arith.constant 0 : index
    %c0_4 = arith.constant 0 : index
    %1 = vector.load %arg2[%c0_1, %c0_2, %c0_3, %c0_4] : memref<1x8x32x19xbf16, #tpu.memory_space<vmem>>, vector<1x1x32x19xbf16>
    %2 = vector.shape_cast %1 : vector<1x1x32x19xbf16> to vector<32x19xbf16>
    %cst = arith.constant dense<0.000000e+00> : vector<32x16xf32>
    %3 = tpu.matmul %2, %0, %cst {dimension_numbers = #tpu.dot_dimension_numbers<[1], [0], [0], [1], [0, 0, 1, 1], [], []>} : vector<32x19xbf16>, vector<19x16xbf16>, vector<32x16xf32> -> vector<32x16xf32>
    %c0_5 = arith.constant 0 : index
    %c1 = arith.constant 1 : index
    %c0_6 = arith.constant 0 : index
    %c0_7 = arith.constant 0 : index
    %4 = vector.load %arg2[%c0_5, %c1, %c0_6, %c0_7] : memref<1x8x32x19xbf16, #tpu.memory_space<vmem>>, vector<1x1x32x19xbf16>
    %5 = vector.shape_cast %4 : vector<1x1x32x19xbf16> to vector<32x19xbf16>
    %cst_8 = arith.constant dense<0.000000e+00> : vector<32x16xf32>
    %6 = tpu.matmul %5, %0, %cst_8 {dimension_numbers = #tpu.dot_dimension_numbers<[1], [0], [0], [1], [0, 0, 1, 1], [], []>} : vector<32x19xbf16>, vector<19x16xbf16>, vector<32x16xf32> -> vector<32x16xf32>
    %7 = arith.maximumf %3, %6 : vector<32x16xf32>
    %c0_9 = arith.constant 0 : index
    %c2 = arith.constant 2 : index
    %c0_10 = arith.constant 0 : index
    %c0_11 = arith.constant 0 : index
    %8 = vector.load %arg2[%c0_9, %c2, %c0_10, %c0_11] : memref<1x8x32x19xbf16, #tpu.memory_space<vmem>>, vector<1x1x32x19xbf16>
    %9 = vector.shape_cast %8 : vector<1x1x32x19xbf16> to vector<32x19xbf16>
    %cst_12 = arith.constant dense<0.000000e+00> : vector<32x16xf32>
    %10 = tpu.matmul %9, %0, %cst_12 {dimension_numbers = #tpu.dot_dimension_numbers<[1], [0], [0], [1], [0, 0, 1, 1], [], []>} : vector<32x19xbf16>, vector<19x16xbf16>, vector<32x16xf32> -> vector<32x16xf32>
    %11 = arith.maximumf %7, %10 : vector<32x16xf32>
    %c0_13 = arith.constant 0 : index
    %c3 = arith.constant 3 : index
    %c0_14 = arith.constant 0 : index
    %c0_15 = arith.constant 0 : index
    %12 = vector.load %arg2[%c0_13, %c3, %c0_14, %c0_15] : memref<1x8x32x19xbf16, #tpu.memory_space<vmem>>, vector<1x1x32x19xbf16>
    %13 = vector.shape_cast %12 : vector<1x1x32x19xbf16> to vector<32x19xbf16>
    %cst_16 = arith.constant dense<0.000000e+00> : vector<32x16xf32>
    %14 = tpu.matmul %13, %0, %cst_16 {dimension_numbers = #tpu.dot_dimension_numbers<[1], [0], [0], [1], [0, 0, 1, 1], [], []>} : vector<32x19xbf16>, vector<19x16xbf16>, vector<32x16xf32> -> vector<32x16xf32>
    %15 = arith.maximumf %11, %14 : vector<32x16xf32>
    %c0_17 = arith.constant 0 : index
    %c4 = arith.constant 4 : index
    %c0_18 = arith.constant 0 : index
    %c0_19 = arith.constant 0 : index
    %16 = vector.load %arg2[%c0_17, %c4, %c0_18, %c0_19] : memref<1x8x32x19xbf16, #tpu.memory_space<vmem>>, vector<1x1x32x19xbf16>
    %17 = vector.shape_cast %16 : vector<1x1x32x19xbf16> to vector<32x19xbf16>
    %cst_20 = arith.constant dense<0.000000e+00> : vector<32x16xf32>
    %18 = tpu.matmul %17, %0, %cst_20 {dimension_numbers = #tpu.dot_dimension_numbers<[1], [0], [0], [1], [0, 0, 1, 1], [], []>} : vector<32x19xbf16>, vector<19x16xbf16>, vector<32x16xf32> -> vector<32x16xf32>
    %19 = arith.maximumf %15, %18 : vector<32x16xf32>
    %c0_21 = arith.constant 0 : index
    %c5 = arith.constant 5 : index
    %c0_22 = arith.constant 0 : index
    %c0_23 = arith.constant 0 : index
    %20 = vector.load %arg2[%c0_21, %c5, %c0_22, %c0_23] : memref<1x8x32x19xbf16, #tpu.memory_space<vmem>>, vector<1x1x32x19xbf16>
    %21 = vector.shape_cast %20 : vector<1x1x32x19xbf16> to vector<32x19xbf16>
    %cst_24 = arith.constant dense<0.000000e+00> : vector<32x16xf32>
    %22 = tpu.matmul %21, %0, %cst_24 {dimension_numbers = #tpu.dot_dimension_numbers<[1], [0], [0], [1], [0, 0, 1, 1], [], []>} : vector<32x19xbf16>, vector<19x16xbf16>, vector<32x16xf32> -> vector<32x16xf32>
    %23 = arith.maximumf %19, %22 : vector<32x16xf32>
    %c0_25 = arith.constant 0 : index
    %c6 = arith.constant 6 : index
    %c0_26 = arith.constant 0 : index
    %c0_27 = arith.constant 0 : index
    %24 = vector.load %arg2[%c0_25, %c6, %c0_26, %c0_27] : memref<1x8x32x19xbf16, #tpu.memory_space<vmem>>, vector<1x1x32x19xbf16>
    %25 = vector.shape_cast %24 : vector<1x1x32x19xbf16> to vector<32x19xbf16>
    %cst_28 = arith.constant dense<0.000000e+00> : vector<32x16xf32>
    %26 = tpu.matmul %25, %0, %cst_28 {dimension_numbers = #tpu.dot_dimension_numbers<[1], [0], [0], [1], [0, 0, 1, 1], [], []>} : vector<32x19xbf16>, vector<19x16xbf16>, vector<32x16xf32> -> vector<32x16xf32>
    %27 = arith.maximumf %23, %26 : vector<32x16xf32>
    %c0_29 = arith.constant 0 : index
    %c7 = arith.constant 7 : index
    %c0_30 = arith.constant 0 : index
    %c0_31 = arith.constant 0 : index
    %28 = vector.load %arg2[%c0_29, %c7, %c0_30, %c0_31] : memref<1x8x32x19xbf16, #tpu.memory_space<vmem>>, vector<1x1x32x19xbf16>
    %29 = vector.shape_cast %28 : vector<1x1x32x19xbf16> to vector<32x19xbf16>
    %cst_32 = arith.constant dense<0.000000e+00> : vector<32x16xf32>
    %30 = tpu.matmul %29, %0, %cst_32 {dimension_numbers = #tpu.dot_dimension_numbers<[1], [0], [0], [1], [0, 0, 1, 1], [], []>} : vector<32x19xbf16>, vector<19x16xbf16>, vector<32x16xf32> -> vector<32x16xf32>
    %31 = arith.maximumf %27, %30 : vector<32x16xf32>
    %c0_33 = arith.constant 0 : index
    %c0_34 = arith.constant 0 : index
    %32 = vector.load %arg5[%c0_33, %c0_34] : memref<1x16xf32, #tpu.memory_space<vmem>>, vector<1x16xf32>
    %33 = vector.broadcast %32 : vector<1x16xf32> to vector<32x16xf32>
    %34 = arith.addf %31, %33 : vector<32x16xf32>
    %cst_35 = arith.constant 0.000000e+00 : f32
    %35 = vector.broadcast %cst_35 : f32 to vector<32x16xf32>
    %36 = arith.maximumf %34, %35 : vector<32x16xf32>
    %37 = arith.truncf %36 : vector<32x16xf32> to vector<32x16xbf16>
    %c0_36 = arith.constant 0 : index
    %c0_37 = arith.constant 0 : index
    %38 = vector.load %arg6[%c0_36, %c0_37] : memref<16x64xbf16, #tpu.memory_space<vmem>>, vector<16x64xbf16>
    %cst_38 = arith.constant dense<0.000000e+00> : vector<32x64xf32>
    %39 = tpu.matmul %37, %38, %cst_38 {dimension_numbers = #tpu.dot_dimension_numbers<[1], [0], [0], [1], [0, 0, 1, 1], [], []>} : vector<32x16xbf16>, vector<16x64xbf16>, vector<32x64xf32> -> vector<32x64xf32>
    %c0_39 = arith.constant 0 : index
    %c0_40 = arith.constant 0 : index
    %40 = vector.load %arg7[%c0_39, %c0_40] : memref<1x64xf32, #tpu.memory_space<vmem>>, vector<1x64xf32>
    %41 = vector.broadcast %40 : vector<1x64xf32> to vector<32x64xf32>
    %42 = arith.addf %39, %41 : vector<32x64xf32>
    %cst_41 = arith.constant 0.000000e+00 : f32
    %43 = vector.broadcast %cst_41 : f32 to vector<32x64xf32>
    %44 = arith.maximumf %42, %43 : vector<32x64xf32>
    %45 = arith.truncf %44 : vector<32x64xf32> to vector<32x64xbf16>
    %c0_42 = arith.constant 0 : index
    %c0_43 = arith.constant 0 : index
    %46 = vector.load %arg8[%c0_42, %c0_43] : memref<64x16xbf16, #tpu.memory_space<vmem>>, vector<64x16xbf16>
    %cst_44 = arith.constant dense<0.000000e+00> : vector<32x16xf32>
    %47 = tpu.matmul %45, %46, %cst_44 {dimension_numbers = #tpu.dot_dimension_numbers<[1], [0], [0], [1], [0, 0, 1, 1], [], []>} : vector<32x64xbf16>, vector<64x16xbf16>, vector<32x16xf32> -> vector<32x16xf32>
    %c0_45 = arith.constant 0 : index
    %c0_46 = arith.constant 0 : index
    %48 = vector.load %arg9[%c0_45, %c0_46] : memref<1x16xf32, #tpu.memory_space<vmem>>, vector<1x16xf32>
    %49 = vector.broadcast %48 : vector<1x16xf32> to vector<32x16xf32>
    %50 = arith.addf %47, %49 : vector<32x16xf32>
    %c0_47 = arith.constant 0 : index
    %c0_48 = arith.constant 0 : index
    %c0_49 = arith.constant 0 : index
    %51 = vector.load %arg3[%c0_47, %c0_48, %c0_49] : memref<1x32x16xf32, #tpu.memory_space<vmem>>, vector<1x32x16xf32>
    %52 = vector.shape_cast %51 : vector<1x32x16xf32> to vector<32x16xf32>
    %53 = arith.addf %50, %52 : vector<32x16xf32>
    %cst_50 = arith.constant 0.000000e+00 : f32
    %54 = vector.broadcast %cst_50 : f32 to vector<32x16xf32>
    %55 = arith.maximumf %53, %54 : vector<32x16xf32>
    %c0_51 = arith.constant 0 : index
    %c0_52 = arith.constant 0 : index
    %c0_53 = arith.constant 0 : index
    %56 = vector.load %arg10[%c0_51, %c0_52, %c0_53] : memref<1x32x16xf32, #tpu.memory_space<vmem>>, vector<1x32x16xf32>
    %57 = vector.shape_cast %56 : vector<1x32x16xf32> to vector<32x16xf32>
    %58 = vector.shape_cast %55 : vector<32x16xf32> to vector<1x32x16xf32>
    tpu.vector_store %arg10[%c0_51, %c0_52, %c0_53], %58 {strides = array<i32>} : memref<1x32x16xf32, #tpu.memory_space<vmem>>, vector<1x32x16xf32>,
    return
  }
  func.func @transform_0(%arg0: i32, %arg1: i32) -> (i32, i32, i32, i32) {
    %c0_i32 = arith.constant 0 : i32
    %c0_i32_0 = arith.constant 0 : i32
    %c0_i32_1 = arith.constant 0 : i32
    return %arg0, %c0_i32, %arg1, %c0_i32_0 : i32, i32, i32, i32
  }
  func.func @transform_1(%arg0: i32, %arg1: i32) -> (i32, i32, i32) {
    %c0_i32 = arith.constant 0 : i32
    %c0_i32_0 = arith.constant 0 : i32
    return %arg0, %arg1, %c0_i32 : i32, i32, i32
  }
  func.func @transform_2(%arg0: i32, %arg1: i32) -> (i32, i32) {
    %c0_i32 = arith.constant 0 : i32
    %c0_i32_0 = arith.constant 0 : i32
    %c0_i32_1 = arith.constant 0 : i32
    return %c0_i32, %c0_i32_0 : i32, i32
  }
  func.func @transform_3(%arg0: i32, %arg1: i32) -> (i32, i32) {
    %c0_i32 = arith.constant 0 : i32
    %c0_i32_0 = arith.constant 0 : i32
    %c0_i32_1 = arith.constant 0 : i32
    return %c0_i32, %c0_i32_0 : i32, i32
  }
  func.func @transform_4(%arg0: i32, %arg1: i32) -> (i32, i32) {
    %c0_i32 = arith.constant 0 : i32
    %c0_i32_0 = arith.constant 0 : i32
    %c0_i32_1 = arith.constant 0 : i32
    return %c0_i32, %c0_i32_0 : i32, i32
  }
  func.func @transform_5(%arg0: i32, %arg1: i32) -> (i32, i32) {
    %c0_i32 = arith.constant 0 : i32
    %c0_i32_0 = arith.constant 0 : i32
    %c0_i32_1 = arith.constant 0 : i32
    return %c0_i32, %c0_i32_0 : i32, i32
  }
  func.func @transform_6(%arg0: i32, %arg1: i32) -> (i32, i32) {
    %c0_i32 = arith.constant 0 : i32
    %c0_i32_0 = arith.constant 0 : i32
    %c0_i32_1 = arith.constant 0 : i32
    return %c0_i32, %c0_i32_0 : i32, i32
  }
  func.func @transform_7(%arg0: i32, %arg1: i32) -> (i32, i32) {
    %c0_i32 = arith.constant 0 : i32
    %c0_i32_0 = arith.constant 0 : i32
    %c0_i32_1 = arith.constant 0 : i32
    return %c0_i32, %c0_i32_0 : i32, i32
  }
  func.func @transform_8(%arg0: i32, %arg1: i32) -> (i32, i32, i32) {
    %c0_i32 = arith.constant 0 : i32
    %c0_i32_0 = arith.constant 0 : i32
    return %arg0, %arg1, %c0_i32 : i32, i32, i32
  }
}

</mosaic_0001>

<llo_original>
// kernel: invres_mlp_forward.1
$region0: #{invres_mlp_forward.1}
  #allocation0 [shape = 'u32[]', space=smem, size = 0x4, offset = 0x4, fixed_abs, tag = 'smem constant byte address 0x4 - core index']
  #allocation1 [shape = 'u32[144,128]{1,0:T(1,128)}', space=vmem, size = 0x12000, scoped, tag = 'internal scratch']
  %s0 = inlined_call_operand.vmem [shape: bf16[2,8,32,19], index: 0, kind: input, shape index: {}]
  %s1 = inlined_call_operand.vmem [shape: f32[2,32,16], index: 1, kind: input, shape index: {}]
  %s2 = inlined_call_operand.vmem [shape: bf16[19,16], index: 2, kind: input, shape index: {}]
  %s3 = inlined_call_operand.vmem [shape: f32[1,16], index: 3, kind: input, shape index: {}]
  %s4 = inlined_call_operand.vmem [shape: bf16[16,64], index: 4, kind: input, shape index: {}]
  %s5 = inlined_call_operand.vmem [shape: f32[1,64], index: 5, kind: input, shape index: {}]
  %s6 = inlined_call_operand.vmem [shape: bf16[64,16], index: 6, kind: input, shape index: {}]
  %s7 = inlined_call_operand.vmem [shape: f32[1,16], index: 7, kind: input, shape index: {}]
  %s8 = inlined_call_operand.vmem [shape: f32[2,32,16], index: 8, kind: output, shape index: {}]
  %s9 = sld [smem:[#allocation0]]
  $region65: #{invres_mlp_forward.1} parent=0
    _
  %s11 = ssub.s32 1, %s9
  %s12 = scalar_select 0, %s11, %s9
  loop: start=0, step=1, limit=4
  $region2: #{invres_mlp_forward.1} parent=0 // loop_pre_header
    _
  $region3: #{invres_mlp_forward.1} parent=0 // loop_header
    %s14 = sphi 0, %s18
    %p15 = scmp.ge.s32.totalorder %s14, 4
    %s21 = sphi 0, %s33
    %s22 = sphi 0, %s29
    %s23 = sphi 0, %s21
    %s24 = sphi 0, %s22
    %s25 = sphi 0, %s23
    %s26 = sphi 0, %s24
    %s38 = sphi 0, %s40
    %s41 = sphi 0, %s38
    %s42 = sphi 0, %s41
    %s58 = sphi 0, %s42
    %s66 = sphi 0, %s68
    %s69 = sphi 0, %s66
    %s70 = sphi 0, %s69
    %s86 = sphi 0, %s70
    %s90 = sphi 0, %s90
    %s92 = sphi 0, %s90
    %s93 = sphi 0, %s92
    %s107 = sphi 0, %s93
    %s111 = sphi 0, %s111
    %s113 = sphi 0, %s111
    %s114 = sphi 0, %s113
    %s128 = sphi 0, %s114
    %s132 = sphi 0, %s132
    %s134 = sphi 0, %s132
    %s135 = sphi 0, %s134
    %s149 = sphi 0, %s135
    %s153 = sphi 0, %s153
    %s155 = sphi 0, %s153
    %s156 = sphi 0, %s155
    %s170 = sphi 0, %s156
    %s174 = sphi 0, %s174
    %s176 = sphi 0, %s174
    %s177 = sphi 0, %s176
    %s191 = sphi 0, %s177
    %s195 = sphi 0, %s195
    %s197 = sphi 0, %s195
    %s198 = sphi 0, %s197
    %s212 = sphi 0, %s198
    %s220 = sphi 0, %s222
    %s223 = sphi 0, %s220
    %s224 = sphi 0, %s223
    %s240 = sphi 0, %s224
  $region4: #{invres_mlp_forward.1} parent=0 // loop_header_branch
    %17 = sbr.rel (%p15) target = $region8
  $region5: #{invres_mlp_forward.1} parent=0 // loop_body
    %s19 = ssub.s32 %s14, 1
    %s20 = ssub.s32 %s14, 2
    %s27 = sadd.s32 1, %s22
    %p28 = scmp.ge.s32.totalorder %s27, 1
    %s29 = scalar_select %p28, 0, %s27
    %s30 = sadd.s32 1, %s21
    %s31 = scalar_select %p28, %s30, %s21
    %p32 = scmp.ge.s32.totalorder %s31, 2
    %s33 = scalar_select %p32, 0, %s31
    %s34 = ssub.s32 %s21, %s33
    %s35 = ssub.s32 %s22, %s29
    %s36 = sor.u32 %s34, %s35
    %p37 = scmp.eq.s32.totalorder %s36, 0
    %s39 = sadd.s32 %s38, 1
    %s40 = scalar_select %p37, %s38, %s39
    %p43 = pneg %p37
    %p44 = scmp.eq.s32.totalorder %s14, 1
    %p45 = por %p43, %p44
    %p46 = scmp.ne.s32.totalorder %s38, %s41
    %p47 = scmp.eq.s32.totalorder %s14, 0
    %p48 = por %p46, %p47
    %p49 = scmp.ne.s32.totalorder %s38, %s41
    %p50 = scmp.eq.s32.totalorder %s19, 1
    %p51 = por %p49, %p50
    %p52 = scmp.ne.s32.totalorder %s41, %s42
    %p53 = scmp.eq.s32.totalorder %s19, 0
    %p54 = por %p52, %p53
    %p55 = scmp.ne.s32.totalorder %s41, %s42
    %p56 = scmp.eq.s32.totalorder %s20, 1
    %p57 = por %p55, %p56
    %p59 = scmp.ne.s32.totalorder %s42, %s58
    %p60 = scmp.eq.s32.totalorder %s20, 0
    %p61 = por %p59, %p60
    %s62 = ssub.s32 %s21, %s33
    %s63 = ssub.s32 %s22, %s29
    %s64 = sor.u32 %s62, %s63
    %p65 = scmp.eq.s32.totalorder %s64, 0
    %s67 = sadd.s32 %s66, 1
    %s68 = scalar_select %p65, %s66, %s67
    %p71 = pneg %p65
    %p72 = scmp.eq.s32.totalorder %s14, 1
    %p73 = por %p71, %p72
    %p74 = scmp.ne.s32.totalorder %s66, %s69
    %p75 = scmp.eq.s32.totalorder %s14, 0
    %p76 = por %p74, %p75
    %p77 = scmp.ne.s32.totalorder %s66, %s69
    %p78 = scmp.eq.s32.totalorder %s19, 1
    %p79 = por %p77, %p78
    %p80 = scmp.ne.s32.totalorder %s69, %s70
    %p81 = scmp.eq.s32.totalorder %s19, 0
    %p82 = por %p80, %p81
    %p83 = scmp.ne.s32.totalorder %s69, %s70
    %p84 = scmp.eq.s32.totalorder %s20, 1
    %p85 = por %p83, %p84
    %p87 = scmp.ne.s32.totalorder %s70, %s86
    %p88 = scmp.eq.s32.totalorder %s20, 0
    %p89 = por %p87, %p88
    %s91 = sadd.s32 %s90, 1
    %p94 = scmp.eq.s32.totalorder %s14, 1
    %p95 = scmp.ne.s32.totalorder %s90, %s92
    %p96 = scmp.eq.s32.totalorder %s14, 0
    %p97 = por %p95, %p96
    %p98 = scmp.ne.s32.totalorder %s90, %s92
    %p99 = scmp.eq.s32.totalorder %s19, 1
    %p100 = por %p98, %p99
    %p101 = scmp.ne.s32.totalorder %s92, %s93
    %p102 = scmp.eq.s32.totalorder %s19, 0
    %p103 = por %p101, %p102
    %p104 = scmp.ne.s32.totalorder %s92, %s93
    %p105 = scmp.eq.s32.totalorder %s20, 1
    %p106 = por %p104, %p105
    %p108 = scmp.ne.s32.totalorder %s93, %s107
    %p109 = scmp.eq.s32.totalorder %s20, 0
    %p110 = por %p108, %p109
    %s112 = sadd.s32 %s111, 1
    %p115 = scmp.eq.s32.totalorder %s14, 1
    %p116 = scmp.ne.s32.totalorder %s111, %s113
    %p117 = scmp.eq.s32.totalorder %s14, 0
    %p118 = por %p116, %p117
    %p119 = scmp.ne.s32.totalorder %s111, %s113
    %p120 = scmp.eq.s32.totalorder %s19, 1
    %p121 = por %p119, %p120
    %p122 = scmp.ne.s32.totalorder %s113, %s114
    %p123 = scmp.eq.s32.totalorder %s19, 0
    %p124 = por %p122, %p123
    %p125 = scmp.ne.s32.totalorder %s113, %s114
    %p126 = scmp.eq.s32.totalorder %s20, 1
    %p127 = por %p125, %p126
    %p129 = scmp.ne.s32.totalorder %s114, %s128
    %p130 = scmp.eq.s32.totalorder %s20, 0
    %p131 = por %p129, %p130
    %s133 = sadd.s32 %s132, 1
    %p136 = scmp.eq.s32.totalorder %s14, 1
    %p137 = scmp.ne.s32.totalorder %s132, %s134
    %p138 = scmp.eq.s32.totalorder %s14, 0
    %p139 = por %p137, %p138
    %p140 = scmp.ne.s32.totalorder %s132, %s134
    %p141 = scmp.eq.s32.totalorder %s19, 1
    %p142 = por %p140, %p141
    %p143 = scmp.ne.s32.totalorder %s134, %s135
    %p144 = scmp.eq.s32.totalorder %s19, 0
    %p145 = por %p143, %p144
    %p146 = scmp.ne.s32.totalorder %s134, %s135
    %p147 = scmp.eq.s32.totalorder %s20, 1
    %p148 = por %p146, %p147
    %p150 = scmp.ne.s32.totalorder %s135, %s149
    %p151 = scmp.eq.s32.totalorder %s20, 0
    %p152 = por %p150, %p151
    %s154 = sadd.s32 %s153, 1
    %p157 = scmp.eq.s32.totalorder %s14, 1
    %p158 = scmp.ne.s32.totalorder %s153, %s155
    %p159 = scmp.eq.s32.totalorder %s14, 0
    %p160 = por %p158, %p159
    %p161 = scmp.ne.s32.totalorder %s153, %s155
    %p162 = scmp.eq.s32.totalorder %s19, 1
    %p163 = por %p161, %p162
    %p164 = scmp.ne.s32.totalorder %s155, %s156
    %p165 = scmp.eq.s32.totalorder %s19, 0
    %p166 = por %p164, %p165
    %p167 = scmp.ne.s32.totalorder %s155, %s156
    %p168 = scmp.eq.s32.totalorder %s20, 1
    %p169 = por %p167, %p168
    %p171 = scmp.ne.s32.totalorder %s156, %s170
    %p172 = scmp.eq.s32.totalorder %s20, 0
    %p173 = por %p171, %p172
    %s175 = sadd.s32 %s174, 1
    %p178 = scmp.eq.s32.totalorder %s14, 1
    %p179 = scmp.ne.s32.totalorder %s174, %s176
    %p180 = scmp.eq.s32.totalorder %s14, 0
    %p181 = por %p179, %p180
    %p182 = scmp.ne.s32.totalorder %s174, %s176
    %p183 = scmp.eq.s32.totalorder %s19, 1
    %p184 = por %p182, %p183
    %p185 = scmp.ne.s32.totalorder %s176, %s177
    %p186 = scmp.eq.s32.totalorder %s19, 0
    %p187 = por %p185, %p186
    %p188 = scmp.ne.s32.totalorder %s176, %s177
    %p189 = scmp.eq.s32.totalorder %s20, 1
    %p190 = por %p188, %p189
    %p192 = scmp.ne.s32.totalorder %s177, %s191
    %p193 = scmp.eq.s32.totalorder %s20, 0
    %p194 = por %p192, %p193
    %s196 = sadd.s32 %s195, 1
    %p199 = scmp.eq.s32.totalorder %s14, 1
    %p200 = scmp.ne.s32.totalorder %s195, %s197
    %p201 = scmp.eq.s32.totalorder %s14, 0
    %p202 = por %p200, %p201
    %p203 = scmp.ne.s32.totalorder %s195, %s197
    %p204 = scmp.eq.s32.totalorder %s19, 1
    %p205 = por %p203, %p204
    %p206 = scmp.ne.s32.totalorder %s197, %s198
    %p207 = scmp.eq.s32.totalorder %s19, 0
    %p208 = por %p206, %p207
    %p209 = scmp.ne.s32.totalorder %s197, %s198
    %p210 = scmp.eq.s32.totalorder %s20, 1
    %p211 = por %p209, %p210
    %p213 = scmp.ne.s32.totalorder %s198, %s212
    %p214 = scmp.eq.s32.totalorder %s20, 0
    %p215 = por %p213, %p214
    %s216 = ssub.s32 %s21, %s33
    %s217 = ssub.s32 %s22, %s29
    %s218 = sor.u32 %s216, %s217
    %p219 = scmp.eq.s32.totalorder %s218, 0
    %s221 = sadd.s32 %s220, 1
    %s222 = scalar_select %p219, %s220, %s221
    %p225 = pneg %p219
    %p226 = scmp.eq.s32.totalorder %s14, 1
    %p227 = por %p225, %p226
    %p228 = scmp.ne.s32.totalorder %s220, %s223
    %p229 = scmp.eq.s32.totalorder %s14, 0
    %p230 = por %p228, %p229
    %p231 = scmp.ne.s32.totalorder %s220, %s223
    %p232 = scmp.eq.s32.totalorder %s19, 1
    %p233 = por %p231, %p232
    %p234 = scmp.ne.s32.totalorder %s223, %s224
    %p235 = scmp.eq.s32.totalorder %s19, 0
    %p236 = por %p234, %p235
    %p237 = scmp.ne.s32.totalorder %s223, %s224
    %p238 = scmp.eq.s32.totalorder %s20, 1
    %p239 = por %p237, %p238
    %p241 = scmp.ne.s32.totalorder %s224, %s240
    %p242 = scmp.eq.s32.totalorder %s20, 0
    %p243 = por %p241, %p242
    %p244 = scmp.le.s32.totalorder 1, %s14
    %p245 = scmp.lt.s32.totalorder %s14, 3
    %p246 = pnand %p244, %p245
    %p247 = pneg %p246
    // Predicated region
    $region9: #{invres_mlp_forward.1} parent=5 // pred_check
      _
    $region10: #{invres_mlp_forward.1} parent=5 // pred_check_branch
      %249 = sbr.rel (%p246) target = $region12
    $region11: #{invres_mlp_forward.1} parent=5 // pred_region
      %s250 = ssub.s32 %s14, 1
      // Predicated region
      $region13: #{invres_mlp_forward.1} parent=11 // pred_check
        %p251 = pneg %p103
      $region14: #{invres_mlp_forward.1} parent=11 // pred_check_branch
        %253 = sbr.rel (%p251) target = $region16
      $region15: #{invres_mlp_forward.1} parent=11 // pred_region
        _
      $region16: #{invres_mlp_forward.1} parent=11 // pred_fallthru
        _
      // Predicated region
      $region17: #{invres_mlp_forward.1} parent=11 // pred_check
        %p254 = pneg %p124
      $region18: #{invres_mlp_forward.1} parent=11 // pred_check_branch
        %256 = sbr.rel (%p254) target = $region20
      $region19: #{invres_mlp_forward.1} parent=11 // pred_region
        _
      $region20: #{invres_mlp_forward.1} parent=11 // pred_fallthru
        _
      // Predicated region
      $region21: #{invres_mlp_forward.1} parent=11 // pred_check
        %p257 = pneg %p145
      $region22: #{invres_mlp_forward.1} parent=11 // pred_check_branch
        %259 = sbr.rel (%p257) target = $region24
      $region23: #{invres_mlp_forward.1} parent=11 // pred_region
        _
      $region24: #{invres_mlp_forward.1} parent=11 // pred_fallthru
        _
      // Predicated region
      $region25: #{invres_mlp_forward.1} parent=11 // pred_check
        %p260 = pneg %p166
      $region26: #{invres_mlp_forward.1} parent=11 // pred_check_branch
        %262 = sbr.rel (%p260) target = $region28
      $region27: #{invres_mlp_forward.1} parent=11 // pred_region
        _
      $region28: #{invres_mlp_forward.1} parent=11 // pred_fallthru
        _
      // Predicated region
      $region29: #{invres_mlp_forward.1} parent=11 // pred_check
        %p263 = pneg %p187
      $region30: #{invres_mlp_forward.1} parent=11 // pred_check_branch
        %265 = sbr.rel (%p263) target = $region32
      $region31: #{invres_mlp_forward.1} parent=11 // pred_region
        _
      $region32: #{invres_mlp_forward.1} parent=11 // pred_fallthru
        _
      // Predicated region
      $region33: #{invres_mlp_forward.1} parent=11 // pred_check
        %p266 = pneg %p208
      $region34: #{invres_mlp_forward.1} parent=11 // pred_check_branch
        %268 = sbr.rel (%p266) target = $region36
      $region35: #{invres_mlp_forward.1} parent=11 // pred_region
        _
      $region36: #{invres_mlp_forward.1} parent=11 // pred_fallthru
        _
    $region12: #{invres_mlp_forward.1} parent=5 // pred_fallthru
      _
    %p269 = scmp.lt.s32.totalorder %s14, 2
    // Predicated region
    $region37: #{invres_mlp_forward.1} parent=5 // pred_check
      %p270 = pneg %p269
    $region38: #{invres_mlp_forward.1} parent=5 // pred_check_branch
      %272 = sbr.rel (%p270) target = $region40
    $region39: #{invres_mlp_forward.1} parent=5 // pred_region
      // Predicated region
      $region41: #{invres_mlp_forward.1} parent=39 // pred_check
        %p273 = pneg %p48
      $region42: #{invres_mlp_forward.1} parent=39 // pred_check_branch
        %275 = sbr.rel (%p273) target = $region44
      $region43: #{invres_mlp_forward.1} parent=39 // pred_region
        %s276 = smul.u32 4, %s22
        %p277 = scmp.lt.s32.totalorder %s21, 1
        %s278 = scalar_select %p277, %s21, 1
        %p279 = scmp.lt.s32.totalorder %s276, 3
        %s280 = scalar_select %p279, %s276, 3
        %s281 = smul.addr %s278, 32
        %s282 = sadd.s32 %s280, %s281
        %s283 = smul.addr %s282, 4
        %s284 = scalar_lea.vmem %s0, %s283
        %s285 = smul.u32 4, %s22
      $region44: #{invres_mlp_forward.1} parent=39 // pred_fallthru
        _
      // Predicated region
      $region45: #{invres_mlp_forward.1} parent=39 // pred_check
        %p286 = pneg %p76
      $region46: #{invres_mlp_forward.1} parent=39 // pred_check_branch
        %288 = sbr.rel (%p286) target = $region48
      $region47: #{invres_mlp_forward.1} parent=39 // pred_region
        %s289 = smul.u32 4, %s22
        %p290 = scmp.lt.s32.totalorder %s21, 1
        %s291 = scalar_select %p290, %s21, 1
        %p292 = scmp.lt.s32.totalorder %s289, 3
        %s293 = scalar_select %p292, %s289, 3
        %s294 = smul.addr %s291, 4
        %s295 = sadd.s32 %s293, %s294
        %s296 = smul.addr %s295, 8
        %s297 = scalar_lea.vmem %s1, %s296
        %s298 = smul.u32 4, %s22
      $region48: #{invres_mlp_forward.1} parent=39 // pred_fallthru
        _
    $region40: #{invres_mlp_forward.1} parent=5 // pred_fallthru
      _
    %p299 = scmp.le.s32.totalorder 1, %s14
    %p300 = scmp.lt.s32.totalorder %s14, 3
    %p301 = pnand %p299, %p300
    %p302 = pneg %p301
    // Predicated region
    $region49: #{invres_mlp_forward.1} parent=5 // pred_check
      _
    $region50: #{invres_mlp_forward.1} parent=5 // pred_check_branch
      %304 = sbr.rel (%p301) target = $region52
    $region51: #{invres_mlp_forward.1} parent=5 // pred_region
      %s305 = ssub.s32 %s14, 1
      %s306 = smul.u32 4, %s24
      %p307 = scmp.lt.s32.totalorder %s23, 1
      %s308 = scalar_select %p307, %s23, 1
      %p309 = scmp.lt.s32.totalorder %s306, 3
      %s310 = scalar_select %p309, %s306, 3
      %s311 = smul.addr %s308, 32
      %s312 = sadd.s32 %s310, %s311
      %s313 = smul.addr %s312, 4
      %s314 = scalar_lea.vmem %s0, %s313
      %p315 = pneg %p54
      %p316 = pneg %p51
      %s317 = smul.u32 4, %s24
      %p318 = scmp.lt.s32.totalorder %s23, 1
      %s319 = scalar_select %p318, %s23, 1
      %p320 = scmp.lt.s32.totalorder %s317, 3
      %s321 = scalar_select %p320, %s317, 3
      %s322 = smul.addr %s319, 4
      %s323 = sadd.s32 %s321, %s322
      %s324 = smul.addr %s323, 8
      %s325 = scalar_lea.vmem %s1, %s324
      %p326 = pneg %p82
      %p327 = pneg %p79
      %p328 = pneg %p103
      %p329 = pneg %p100
      %p330 = pneg %p124
      %p331 = pneg %p121
      %p332 = pneg %p145
      %p333 = pneg %p142
      %p334 = pneg %p166
      %p335 = pneg %p163
      %p336 = pneg %p187
      %p337 = pneg %p184
      %p338 = pneg %p208
      %p339 = pneg %p205
      %p340 = pneg %p236
      %p341 = pneg %p233
      %s342 = smul.u32 4, %s24
      %p343 = scmp.lt.s32.totalorder %s23, 1
      %s344 = scalar_select %p343, %s23, 1
      %p345 = scmp.lt.s32.totalorder %s342, 3
      %s346 = scalar_select %p345, %s342, 3
      %s347 = smul.addr %s344, 4
      %s348 = sadd.s32 %s346, %s347
      %s349 = smul.addr %s348, 8
      %s350 = scalar_lea.vmem %s8, %s349
      %s351 = smul.u32 4, %s24
      %p352 = scmp.lt.s32.totalorder %s23, 1
      %s353 = scalar_select %p352, %s23, 1
      %p354 = scmp.lt.s32.totalorder %s351, 3
      %s355 = scalar_select %p354, %s351, 3
      %s356 = smul.addr %s353, 32
      %s357 = sadd.s32 %s355, %s356
      %s358 = smul.addr %s357, 4
      %s359 = scalar_lea.vmem %s0, %s358
      %s360 = smul.u32 4, %s24
      %s361 = smul.u32 4, %s24
      %p362 = scmp.lt.s32.totalorder %s23, 1
      %s363 = scalar_select %p362, %s23, 1
      %p364 = scmp.lt.s32.totalorder %s361, 3
      %s365 = scalar_select %p364, %s361, 3
      %s366 = smul.addr %s363, 4
      %s367 = sadd.s32 %s365, %s366
      %s368 = smul.addr %s367, 8
      %s369 = scalar_lea.vmem %s1, %s368
      %s370 = smul.u32 4, %s24
      %s371 = smul.u32 4, %s24
      %p372 = scmp.lt.s32.totalorder %s23, 1
      %s373 = scalar_select %p372, %s23, 1
      %p374 = scmp.lt.s32.totalorder %s371, 3
      %s375 = scalar_select %p374, %s371, 3
      %s376 = smul.addr %s373, 4
      %s377 = sadd.s32 %s375, %s376
      %s378 = smul.addr %s377, 8
      %s379 = scalar_lea.vmem %s8, %s378
      %s380 = smul.u32 4, %s24
      %v382 = vld [vmem:[%s2] sm:$0xf]
      %v383 = vld [vmem:[%s2 + $0x4] sm:$0xf]
      %v384 = vld [vmem:[%s2 + $0x8] sm:$0x3]
      %v385 = vld [vmem:[%s359] sm:$0xf]
      %v386 = vld [vmem:[%s359 + $0x4] sm:$0xf]
      %v387 = vld [vmem:[%s359 + $0x8] sm:$0xf]
      %v388 = vld [vmem:[%s359 + $0xc] sm:$0xf]
      %v393 = vunpack.c.l.b16 %v385
      %v394 = vunpack.c.l.b16 %v386
      %v395 = vunpack.c.l.b16 %v387
      %v396 = vunpack.c.l.b16 %v388
      %v397 = vpack.c.b16 %v394, %v393
      %v398 = vpack.c.b16 %v396, %v395
      %v402 = vunpack.c.l.b16 %v382
      %v403 = vunpack.c.l.b16 %v383
      %v404 = vunpack.c.l.b16 %v384
      %v405 = vpack.c.b16 %v403, %v402
      %v406 = vpack.c.b16 %v404, %v404
      %vm408 = vcmask 154624
      %v410 = vsel %vm408, %v397, 0
      %v413 = vsel %vm408, %v398, 0
      %vm415 = vcmask 1040384
      %vm416 = vcmask 1041408
      %v417 = vsel %vm415, 4294967295, 65535
      %v418 = vsel %vm416, %v417, 0
      %v420 = vand.u32 %v406, %v418
      %422 = vmatprep.subr.bf16.mxu0 0
      %423 = vmatpush1.bf16.msra.mxu0 %v405
      %424 = vmatprep.subr.bf16.mxu0 0
      %425 = vmatpush1.bf16.msra.mxu0 %v420
      %426 = vmatprep.subr.bf16.mxu0 0
      %427 = vmatpush1.bf16.msra.mxu0 0
      %428 = vmatprep.subr.bf16.mxu0 0
      %429 = vmatpush1.bf16.msra.mxu0 0
      %430 = vmatprep.subr.bf16.mxu0 0
      %431 = vmatpush1.bf16.msra.mxu0 0
      %432 = vmatprep.subr.bf16.mxu0 0
      %433 = vmatpush1.bf16.msra.mxu0 0
      %434 = vmatprep.subr.bf16.mxu0 0
      %435 = vmatpush1.bf16.msra.mxu0 0
      %436 = vmatprep.subr.bf16.mxu0 0
      %437 = vmatpush1.bf16.msra.mxu0 0
      %438 = vmatprep.subr.bf16.mxu0 0
      %439 = vmatpush1.bf16.msra.mxu0 0
      %440 = vmatprep.subr.bf16.mxu0 0
      %441 = vmatpush1.bf16.msra.mxu0 0
      %442 = vmatprep.subr.bf16.mxu0 0
      %443 = vmatpush1.bf16.msra.mxu0 0
      %444 = vmatprep.subr.bf16.mxu0 0
      %445 = vmatpush1.bf16.msra.mxu0 0
      %446 = vmatprep.subr.bf16.mxu0 0
      %447 = vmatpush1.bf16.msra.mxu0 0
      %448 = vmatprep.subr.bf16.mxu0 0
      %449 = vmatpush1.bf16.msra.mxu0 0
      %450 = vmatprep.subr.bf16.mxu0 0
      %451 = vmatpush1.bf16.msra.mxu0 0
      %452 = vmatprep.subr.bf16.mxu0 0
      %453 = vmatpush1.bf16.msra.mxu0 0
      %454 = vmatprep.mubr.bf16.mxu0 0
      %455 = vmatmul.mubr.bf16.gmra.mrb[0].mxu0 %v410
      %v456 = vpop.f32.mrb[0].mxu0
      %v457 = vadd.f32 0.0, %v456
      %v458 = vpop.f32.mrb[0].mxu0
      %v459 = vpop.f32.mrb[0].mxu0
      %v460 = vadd.f32 0.0, %v459
      %v461 = vpop.f32.mrb[0].mxu0
      %462 = vmatprep.mubr.bf16.mxu0 0
      %463 = vmatmul.mubr.bf16.gmra.mrb[0].mxu0 %v413
      %v464 = vpop.f32.mrb[0].mxu0
      %v465 = vadd.f32 0.0, %v464
      %v466 = vpop.f32.mrb[0].mxu0
      %v467 = vpop.f32.mrb[0].mxu0
      %v468 = vadd.f32 0.0, %v467
      %v469 = vpop.f32.mrb[0].mxu0
      %470 = vdwg.mxu0
      %s471 = scalar_lea.vmem %s359, 16
      %v472 = vld [vmem:[%s471] sm:$0xf]
      %v473 = vld [vmem:[%s471 + $0x4] sm:$0xf]
      %v474 = vld [vmem:[%s471 + $0x8] sm:$0xf]
      %v475 = vld [vmem:[%s471 + $0xc] sm:$0xf]
      %v480 = vunpack.c.l.b16 %v472
      %v481 = vunpack.c.l.b16 %v473
      %v482 = vunpack.c.l.b16 %v474
      %v483 = vunpack.c.l.b16 %v475
      %v484 = vpack.c.b16 %v481, %v480
      %v485 = vpack.c.b16 %v483, %v482
      %v487 = vsel %vm408, %v484, 0
      %v490 = vsel %vm408, %v485, 0
      %492 = vmatprep.subr.bf16.mxu0 0
      %493 = vmatpush1.bf16.msra.mxu0 %v405
      %494 = vmatprep.subr.bf16.mxu0 0
      %495 = vmatpush1.bf16.msra.mxu0 %v420
      %496 = vmatprep.subr.bf16.mxu0 0
      %497 = vmatpush1.bf16.msra.mxu0 0
      %498 = vmatprep.subr.bf16.mxu0 0
      %499 = vmatpush1.bf16.msra.mxu0 0
      %500 = vmatprep.subr.bf16.mxu0 0
      %501 = vmatpush1.bf16.msra.mxu0 0
      %502 = vmatprep.subr.bf16.mxu0 0
      %503 = vmatpush1.bf16.msra.mxu0 0
      %504 = vmatprep.subr.bf16.mxu0 0
      %505 = vmatpush1.bf16.msra.mxu0 0
      %506 = vmatprep.subr.bf16.mxu0 0
      %507 = vmatpush1.bf16.msra.mxu0 0
      %508 = vmatprep.subr.bf16.mxu0 0
      %509 = vmatpush1.bf16.msra.mxu0 0
      %510 = vmatprep.subr.bf16.mxu0 0
      %511 = vmatpush1.bf16.msra.mxu0 0
      %512 = vmatprep.subr.bf16.mxu0 0
      %513 = vmatpush1.bf16.msra.mxu0 0
      %514 = vmatprep.subr.bf16.mxu0 0
      %515 = vmatpush1.bf16.msra.mxu0 0
      %516 = vmatprep.subr.bf16.mxu0 0
      %517 = vmatpush1.bf16.msra.mxu0 0
      %518 = vmatprep.subr.bf16.mxu0 0
      %519 = vmatpush1.bf16.msra.mxu0 0
      %520 = vmatprep.subr.bf16.mxu0 0
      %521 = vmatpush1.bf16.msra.mxu0 0
      %522 = vmatprep.subr.bf16.mxu0 0
      %523 = vmatpush1.bf16.msra.mxu0 0
      %524 = vmatprep.mubr.bf16.mxu0 0
      %525 = vmatmul.mubr.bf16.gmra.mrb[0].mxu0 %v487
      %v526 = vpop.f32.mrb[0].mxu0
      %v527 = vadd.f32 0.0, %v526
      %v528 = vpop.f32.mrb[0].mxu0
      %v529 = vpop.f32.mrb[0].mxu0
      %v530 = vadd.f32 0.0, %v529
      %v531 = vpop.f32.mrb[0].mxu0
      %532 = vmatprep.mubr.bf16.mxu0 0
      %533 = vmatmul.mubr.bf16.gmra.mrb[0].mxu0 %v490
      %v534 = vpop.f32.mrb[0].mxu0
      %v535 = vadd.f32 0.0, %v534
      %v536 = vpop.f32.mrb[0].mxu0
      %v537 = vpop.f32.mrb[0].mxu0
      %v538 = vadd.f32 0.0, %v537
      %v539 = vpop.f32.mrb[0].mxu0
      %540 = vdwg.mxu0
      %v541 = vmax.f32 %v457, %v527
      %v542 = vmax.f32 %v460, %v530
      %v543 = vmax.f32 %v465, %v535
      %v544 = vmax.f32 %v468, %v538
      %s545 = scalar_lea.vmem %s359, 32
      %v546 = vld [vmem:[%s545] sm:$0xf]
      %v547 = vld [vmem:[%s545 + $0x4] sm:$0xf]
      %v548 = vld [vmem:[%s545 + $0x8] sm:$0xf]
      %v549 = vld [vmem:[%s545 + $0xc] sm:$0xf]
      %v554 = vunpack.c.l.b16 %v546
      %v555 = vunpack.c.l.b16 %v547
      %v556 = vunpack.c.l.b16 %v548
      %v557 = vunpack.c.l.b16 %v549
      %v558 = vpack.c.b16 %v555, %v554
      %v559 = vpack.c.b16 %v557, %v556
      %v561 = vsel %vm408, %v558, 0
      %v564 = vsel %vm408, %v559, 0
      %566 = vmatprep.subr.bf16.mxu0 0
      %567 = vmatpush1.bf16.msra.mxu0 %v405
      %568 = vmatprep.subr.bf16.mxu0 0
      %569 = vmatpush1.bf16.msra.mxu0 %v420
      %570 = vmatprep.subr.bf16.mxu0 0
      %571 = vmatpush1.bf16.msra.mxu0 0
      %572 = vmatprep.subr.bf16.mxu0 0
      %573 = vmatpush1.bf16.msra.mxu0 0
      %574 = vmatprep.subr.bf16.mxu0 0
      %575 = vmatpush1.bf16.msra.mxu0 0
      %576 = vmatprep.subr.bf16.mxu0 0
      %577 = vmatpush1.bf16.msra.mxu0 0
      %578 = vmatprep.subr.bf16.mxu0 0
      %579 = vmatpush1.bf16.msra.mxu0 0
      %580 = vmatprep.subr.bf16.mxu0 0
      %581 = vmatpush1.bf16.msra.mxu0 0
      %582 = vmatprep.subr.bf16.mxu0 0
      %583 = vmatpush1.bf16.msra.mxu0 0
      %584 = vmatprep.subr.bf16.mxu0 0
      %585 = vmatpush1.bf16.msra.mxu0 0
      %586 = vmatprep.subr.bf16.mxu0 0
      %587 = vmatpush1.bf16.msra.mxu0 0
      %588 = vmatprep.subr.bf16.mxu0 0
      %589 = vmatpush1.bf16.msra.mxu0 0
      %590 = vmatprep.subr.bf16.mxu0 0
      %591 = vmatpush1.bf16.msra.mxu0 0
      %592 = vmatprep.subr.bf16.mxu0 0
      %593 = vmatpush1.bf16.msra.mxu0 0
      %594 = vmatprep.subr.bf16.mxu0 0
      %595 = vmatpush1.bf16.msra.mxu0 0
      %596 = vmatprep.subr.bf16.mxu0 0
      %597 = vmatpush1.bf16.msra.mxu0 0
      %598 = vmatprep.mubr.bf16.mxu0 0
      %599 = vmatmul.mubr.bf16.gmra.mrb[0].mxu0 %v561
      %v600 = vpop.f32.mrb[0].mxu0
      %v601 = vadd.f32 0.0, %v600
      %v602 = vpop.f32.mrb[0].mxu0
      %v603 = vpop.f32.mrb[0].mxu0
      %v604 = vadd.f32 0.0, %v603
      %v605 = vpop.f32.mrb[0].mxu0
      %606 = vmatprep.mubr.bf16.mxu0 0
      %607 = vmatmul.mubr.bf16.gmra.mrb[0].mxu0 %v564
      %v608 = vpop.f32.mrb[0].mxu0
      %v609 = vadd.f32 0.0, %v608
      %v610 = vpop.f32.mrb[0].mxu0
      %v611 = vpop.f32.mrb[0].mxu0
      %v612 = vadd.f32 0.0, %v611
      %v613 = vpop.f32.mrb[0].mxu0
      %614 = vdwg.mxu0
      %v615 = vmax.f32 %v541, %v601
      %v616 = vmax.f32 %v542, %v604
      %v617 = vmax.f32 %v543, %v609
      %v618 = vmax.f32 %v544, %v612
      %s619 = scalar_lea.vmem %s359, 48
      %v620 = vld [vmem:[%s619] sm:$0xf]
      %v621 = vld [vmem:[%s619 + $0x4] sm:$0xf]
      %v622 = vld [vmem:[%s619 + $0x8] sm:$0xf]
      %v623 = vld [vmem:[%s619 + $0xc] sm:$0xf]
      %v628 = vunpack.c.l.b16 %v620
      %v629 = vunpack.c.l.b16 %v621
      %v630 = vunpack.c.l.b16 %v622
      %v631 = vunpack.c.l.b16 %v623
      %v632 = vpack.c.b16 %v629, %v628
      %v633 = vpack.c.b16 %v631, %v630
      %v635 = vsel %vm408, %v632, 0
      %v638 = vsel %vm408, %v633, 0
      %640 = vmatprep.subr.bf16.mxu0 0
      %641 = vmatpush1.bf16.msra.mxu0 %v405
      %642 = vmatprep.subr.bf16.mxu0 0
      %643 = vmatpush1.bf16.msra.mxu0 %v420
      %644 = vmatprep.subr.bf16.mxu0 0
      %645 = vmatpush1.bf16.msra.mxu0 0
      %646 = vmatprep.subr.bf16.mxu0 0
      %647 = vmatpush1.bf16.msra.mxu0 0
      %648 = vmatprep.subr.bf16.mxu0 0
      %649 = vmatpush1.bf16.msra.mxu0 0
      %650 = vmatprep.subr.bf16.mxu0 0
      %651 = vmatpush1.bf16.msra.mxu0 0
      %652 = vmatprep.subr.bf16.mxu0 0
      %653 = vmatpush1.bf16.msra.mxu0 0
      %654 = vmatprep.subr.bf16.mxu0 0
      %655 = vmatpush1.bf16.msra.mxu0 0
      %656 = vmatprep.subr.bf16.mxu0 0
      %657 = vmatpush1.bf16.msra.mxu0 0
      %658 = vmatprep.subr.bf16.mxu0 0
      %659 = vmatpush1.bf16.msra.mxu0 0
      %660 = vmatprep.subr.bf16.mxu0 0
      %661 = vmatpush1.bf16.msra.mxu0 0
      %662 = vmatprep.subr.bf16.mxu0 0
      %663 = vmatpush1.bf16.msra.mxu0 0
      %664 = vmatprep.subr.bf16.mxu0 0
      %665 = vmatpush1.bf16.msra.mxu0 0
      %666 = vmatprep.subr.bf16.mxu0 0
      %667 = vmatpush1.bf16.msra.mxu0 0
      %668 = vmatprep.subr.bf16.mxu0 0
      %669 = vmatpush1.bf16.msra.mxu0 0
      %670 = vmatprep.subr.bf16.mxu0 0
      %671 = vmatpush1.bf16.msra.mxu0 0
      %672 = vmatprep.mubr.bf16.mxu0 0
      %673 = vmatmul.mubr.bf16.gmra.mrb[0].mxu0 %v635
      %v674 = vpop.f32.mrb[0].mxu0
      %v675 = vadd.f32 0.0, %v674
      %v676 = vpop.f32.mrb[0].mxu0
      %v677 = vpop.f32.mrb[0].mxu0
      %v678 = vadd.f32 0.0, %v677
      %v679 = vpop.f32.mrb[0].mxu0
      %680 = vmatprep.mubr.bf16.mxu0 0
      %681 = vmatmul.mubr.bf16.gmra.mrb[0].mxu0 %v638
      %v682 = vpop.f32.mrb[0].mxu0
      %v683 = vadd.f32 0.0, %v682
      %v684 = vpop.f32.mrb[0].mxu0
      %v685 = vpop.f32.mrb[0].mxu0
      %v686 = vadd.f32 0.0, %v685
      %v687 = vpop.f32.mrb[0].mxu0
      %688 = vdwg.mxu0
      %v689 = vmax.f32 %v615, %v675
      %v690 = vmax.f32 %v616, %v678
      %v691 = vmax.f32 %v617, %v683
      %v692 = vmax.f32 %v618, %v686
      %s693 = scalar_lea.vmem %s359, 64
      %v694 = vld [vmem:[%s693] sm:$0xf]
      %v695 = vld [vmem:[%s693 + $0x4] sm:$0xf]
      %v696 = vld [vmem:[%s693 + $0x8] sm:$0xf]
      %v697 = vld [vmem:[%s693 + $0xc] sm:$0xf]
      %v702 = vunpack.c.l.b16 %v694
      %v703 = vunpack.c.l.b16 %v695
      %v704 = vunpack.c.l.b16 %v696
      %v705 = vunpack.c.l.b16 %v697
      %v706 = vpack.c.b16 %v703, %v702
      %v707 = vpack.c.b16 %v705, %v704
      %v709 = vsel %vm408, %v706, 0
      %v712 = vsel %vm408, %v707, 0
      %714 = vmatprep.subr.bf16.mxu0 0
      %715 = vmatpush1.bf16.msra.mxu0 %v405
      %716 = vmatprep.subr.bf16.mxu0 0
      %717 = vmatpush1.bf16.msra.mxu0 %v420
      %718 = vmatprep.subr.bf16.mxu0 0
      %719 = vmatpush1.bf16.msra.mxu0 0
      %720 = vmatprep.subr.bf16.mxu0 0
      %721 = vmatpush1.bf16.msra.mxu0 0
      %722 = vmatprep.subr.bf16.mxu0 0
      %723 = vmatpush1.bf16.msra.mxu0 0
      %724 = vmatprep.subr.bf16.mxu0 0
      %725 = vmatpush1.bf16.msra.mxu0 0
      %726 = vmatprep.subr.bf16.mxu0 0
      %727 = vmatpush1.bf16.msra.mxu0 0
      %728 = vmatprep.subr.bf16.mxu0 0
      %729 = vmatpush1.bf16.msra.mxu0 0
      %730 = vmatprep.subr.bf16.mxu0 0
      %731 = vmatpush1.bf16.msra.mxu0 0
      %732 = vmatprep.subr.bf16.mxu0 0
      %733 = vmatpush1.bf16.msra.mxu0 0
      %734 = vmatprep.subr.bf16.mxu0 0
      %735 = vmatpush1.bf16.msra.mxu0 0
      %736 = vmatprep.subr.bf16.mxu0 0
      %737 = vmatpush1.bf16.msra.mxu0 0
      %738 = vmatprep.subr.bf16.mxu0 0
      %739 = vmatpush1.bf16.msra.mxu0 0
      %740 = vmatprep.subr.bf16.mxu0 0
      %741 = vmatpush1.bf16.msra.mxu0 0
      %742 = vmatprep.subr.bf16.mxu0 0
      %743 = vmatpush1.bf16.msra.mxu0 0
      %744 = vmatprep.subr.bf16.mxu0 0
      %745 = vmatpush1.bf16.msra.mxu0 0
      %746 = vmatprep.mubr.bf16.mxu0 0
      %747 = vmatmul.mubr.bf16.gmra.mrb[0].mxu0 %v709
      %v748 = vpop.f32.mrb[0].mxu0
      %v749 = vadd.f32 0.0, %v748
      %v750 = vpop.f32.mrb[0].mxu0
      %v751 = vpop.f32.mrb[0].mxu0
      %v752 = vadd.f32 0.0, %v751
      %v753 = vpop.f32.mrb[0].mxu0
      %754 = vmatprep.mubr.bf16.mxu0 0
      %755 = vmatmul.mubr.bf16.gmra.mrb[0].mxu0 %v712
      %v756 = vpop.f32.mrb[0].mxu0
      %v757 = vadd.f32 0.0, %v756
      %v758 = vpop.f32.mrb[0].mxu0
      %v759 = vpop.f32.mrb[0].mxu0
      %v760 = vadd.f32 0.0, %v759
      %v761 = vpop.f32.mrb[0].mxu0
      %762 = vdwg.mxu0
      %v763 = vmax.f32 %v689, %v749
      %v764 = vmax.f32 %v690, %v752
      %v765 = vmax.f32 %v691, %v757
      %v766 = vmax.f32 %v692, %v760
      %s767 = scalar_lea.vmem %s359, 80
      %v768 = vld [vmem:[%s767] sm:$0xf]
      %v769 = vld [vmem:[%s767 + $0x4] sm:$0xf]
      %v770 = vld [vmem:[%s767 + $0x8] sm:$0xf]
      %v771 = vld [vmem:[%s767 + $0xc] sm:$0xf]
      %v776 = vunpack.c.l.b16 %v768
      %v777 = vunpack.c.l.b16 %v769
      %v778 = vunpack.c.l.b16 %v770
      %v779 = vunpack.c.l.b16 %v771
      %v780 = vpack.c.b16 %v777, %v776
      %v781 = vpack.c.b16 %v779, %v778
      %v783 = vsel %vm408, %v780, 0
      %v786 = vsel %vm408, %v781, 0
      %788 = vmatprep.subr.bf16.mxu0 0
      %789 = vmatpush1.bf16.msra.mxu0 %v405
      %790 = vmatprep.subr.bf16.mxu0 0
      %791 = vmatpush1.bf16.msra.mxu0 %v420
      %792 = vmatprep.subr.bf16.mxu0 0
      %793 = vmatpush1.bf16.msra.mxu0 0
      %794 = vmatprep.subr.bf16.mxu0 0
      %795 = vmatpush1.bf16.msra.mxu0 0
      %796 = vmatprep.subr.bf16.mxu0 0
      %797 = vmatpush1.bf16.msra.mxu0 0
      %798 = vmatprep.subr.bf16.mxu0 0
      %799 = vmatpush1.bf16.msra.mxu0 0
      %800 = vmatprep.subr.bf16.mxu0 0
      %801 = vmatpush1.bf16.msra.mxu0 0
      %802 = vmatprep.subr.bf16.mxu0 0
      %803 = vmatpush1.bf16.msra.mxu0 0
      %804 = vmatprep.subr.bf16.mxu0 0
      %805 = vmatpush1.bf16.msra.mxu0 0
      %806 = vmatprep.subr.bf16.mxu0 0
      %807 = vmatpush1.bf16.msra.mxu0 0
      %808 = vmatprep.subr.bf16.mxu0 0
      %809 = vmatpush1.bf16.msra.mxu0 0
      %810 = vmatprep.subr.bf16.mxu0 0
      %811 = vmatpush1.bf16.msra.mxu0 0
      %812 = vmatprep.subr.bf16.mxu0 0
      %813 = vmatpush1.bf16.msra.mxu0 0
      %814 = vmatprep.subr.bf16.mxu0 0
      %815 = vmatpush1.bf16.msra.mxu0 0
      %816 = vmatprep.subr.bf16.mxu0 0
      %817 = vmatpush1.bf16.msra.mxu0 0
      %818 = vmatprep.subr.bf16.mxu0 0
      %819 = vmatpush1.bf16.msra.mxu0 0
      %820 = vmatprep.mubr.bf16.mxu0 0
      %821 = vmatmul.mubr.bf16.gmra.mrb[0].mxu0 %v783
      %v822 = vpop.f32.mrb[0].mxu0
      %v823 = vadd.f32 0.0, %v822
      %v824 = vpop.f32.mrb[0].mxu0
      %v825 = vpop.f32.mrb[0].mxu0
      %v826 = vadd.f32 0.0, %v825
      %v827 = vpop.f32.mrb[0].mxu0
      %828 = vmatprep.mubr.bf16.mxu0 0
      %829 = vmatmul.mubr.bf16.gmra.mrb[0].mxu0 %v786
      %v830 = vpop.f32.mrb[0].mxu0
      %v831 = vadd.f32 0.0, %v830
      %v832 = vpop.f32.mrb[0].mxu0
      %v833 = vpop.f32.mrb[0].mxu0
      %v834 = vadd.f32 0.0, %v833
      %v835 = vpop.f32.mrb[0].mxu0
      %836 = vdwg.mxu0
      %v837 = vmax.f32 %v763, %v823
      %v838 = vmax.f32 %v764, %v826
      %v839 = vmax.f32 %v765, %v831
      %v840 = vmax.f32 %v766, %v834
      %s841 = scalar_lea.vmem %s359, 96
      %v842 = vld [vmem:[%s841] sm:$0xf]
      %v843 = vld [vmem:[%s841 + $0x4] sm:$0xf]
      %v844 = vld [vmem:[%s841 + $0x8] sm:$0xf]
      %v845 = vld [vmem:[%s841 + $0xc] sm:$0xf]
      %v850 = vunpack.c.l.b16 %v842
      %v851 = vunpack.c.l.b16 %v843
      %v852 = vunpack.c.l.b16 %v844
      %v853 = vunpack.c.l.b16 %v845
      %v854 = vpack.c.b16 %v851, %v850
      %v855 = vpack.c.b16 %v853, %v852
      %v857 = vsel %vm408, %v854, 0
      %v860 = vsel %vm408, %v855, 0
      %862 = vmatprep.subr.bf16.mxu0 0
      %863 = vmatpush1.bf16.msra.mxu0 %v405
      %864 = vmatprep.subr.bf16.mxu0 0
      %865 = vmatpush1.bf16.msra.mxu0 %v420
      %866 = vmatprep.subr.bf16.mxu0 0
      %867 = vmatpush1.bf16.msra.mxu0 0
      %868 = vmatprep.subr.bf16.mxu0 0
      %869 = vmatpush1.bf16.msra.mxu0 0
      %870 = vmatprep.subr.bf16.mxu0 0
      %871 = vmatpush1.bf16.msra.mxu0 0
      %872 = vmatprep.subr.bf16.mxu0 0
      %873 = vmatpush1.bf16.msra.mxu0 0
      %874 = vmatprep.subr.bf16.mxu0 0
      %875 = vmatpush1.bf16.msra.mxu0 0
      %876 = vmatprep.subr.bf16.mxu0 0
      %877 = vmatpush1.bf16.msra.mxu0 0
      %878 = vmatprep.subr.bf16.mxu0 0
      %879 = vmatpush1.bf16.msra.mxu0 0
      %880 = vmatprep.subr.bf16.mxu0 0
      %881 = vmatpush1.bf16.msra.mxu0 0
      %882 = vmatprep.subr.bf16.mxu0 0
      %883 = vmatpush1.bf16.msra.mxu0 0
      %884 = vmatprep.subr.bf16.mxu0 0
      %885 = vmatpush1.bf16.msra.mxu0 0
      %886 = vmatprep.subr.bf16.mxu0 0
      %887 = vmatpush1.bf16.msra.mxu0 0
      %888 = vmatprep.subr.bf16.mxu0 0
      %889 = vmatpush1.bf16.msra.mxu0 0
      %890 = vmatprep.subr.bf16.mxu0 0
      %891 = vmatpush1.bf16.msra.mxu0 0
      %892 = vmatprep.subr.bf16.mxu0 0
      %893 = vmatpush1.bf16.msra.mxu0 0
      %894 = vmatprep.mubr.bf16.mxu0 0
      %895 = vmatmul.mubr.bf16.gmra.mrb[0].mxu0 %v857
      %v896 = vpop.f32.mrb[0].mxu0
      %v897 = vadd.f32 0.0, %v896
      %v898 = vpop.f32.mrb[0].mxu0
      %v899 = vpop.f32.mrb[0].mxu0
      %v900 = vadd.f32 0.0, %v899
      %v901 = vpop.f32.mrb[0].mxu0
      %902 = vmatprep.mubr.bf16.mxu0 0
      %903 = vmatmul.mubr.bf16.gmra.mrb[0].mxu0 %v860
      %v904 = vpop.f32.mrb[0].mxu0
      %v905 = vadd.f32 0.0, %v904
      %v906 = vpop.f32.mrb[0].mxu0
      %v907 = vpop.f32.mrb[0].mxu0
      %v908 = vadd.f32 0.0, %v907
      %v909 = vpop.f32.mrb[0].mxu0
      %910 = vdwg.mxu0
      %v911 = vmax.f32 %v837, %v897
      %v912 = vmax.f32 %v838, %v900
      %v913 = vmax.f32 %v839, %v905
      %v914 = vmax.f32 %v840, %v908
      %s915 = scalar_lea.vmem %s359, 112
      %v916 = vld [vmem:[%s915] sm:$0xf]
      %v917 = vld [vmem:[%s915 + $0x4] sm:$0xf]
      %v918 = vld [vmem:[%s915 + $0x8] sm:$0xf]
      %v919 = vld [vmem:[%s915 + $0xc] sm:$0xf]
      %v924 = vunpack.c.l.b16 %v916
      %v925 = vunpack.c.l.b16 %v917
      %v926 = vunpack.c.l.b16 %v918
      %v927 = vunpack.c.l.b16 %v919
      %v928 = vpack.c.b16 %v925, %v924
      %v929 = vpack.c.b16 %v927, %v926
      %v931 = vsel %vm408, %v928, 0
      %v934 = vsel %vm408, %v929, 0
      %936 = vmatprep.subr.bf16.mxu0 0
      %937 = vmatpush1.bf16.msra.mxu0 %v405
      %938 = vmatprep.subr.bf16.mxu0 0
      %939 = vmatpush1.bf16.msra.mxu0 %v420
      %940 = vmatprep.subr.bf16.mxu0 0
      %941 = vmatpush1.bf16.msra.mxu0 0
      %942 = vmatprep.subr.bf16.mxu0 0
      %943 = vmatpush1.bf16.msra.mxu0 0
      %944 = vmatprep.subr.bf16.mxu0 0
      %945 = vmatpush1.bf16.msra.mxu0 0
      %946 = vmatprep.subr.bf16.mxu0 0
      %947 = vmatpush1.bf16.msra.mxu0 0
      %948 = vmatprep.subr.bf16.mxu0 0
      %949 = vmatpush1.bf16.msra.mxu0 0
      %950 = vmatprep.subr.bf16.mxu0 0
      %951 = vmatpush1.bf16.msra.mxu0 0
      %952 = vmatprep.subr.bf16.mxu0 0
      %953 = vmatpush1.bf16.msra.mxu0 0
      %954 = vmatprep.subr.bf16.mxu0 0
      %955 = vmatpush1.bf16.msra.mxu0 0
      %956 = vmatprep.subr.bf16.mxu0 0
      %957 = vmatpush1.bf16.msra.mxu0 0
      %958 = vmatprep.subr.bf16.mxu0 0
      %959 = vmatpush1.bf16.msra.mxu0 0
      %960 = vmatprep.subr.bf16.mxu0 0
      %961 = vmatpush1.bf16.msra.mxu0 0
      %962 = vmatprep.subr.bf16.mxu0 0
      %963 = vmatpush1.bf16.msra.mxu0 0
      %964 = vmatprep.subr.bf16.mxu0 0
      %965 = vmatpush1.bf16.msra.mxu0 0
      %966 = vmatprep.subr.bf16.mxu0 0
      %967 = vmatpush1.bf16.msra.mxu0 0
      %968 = vmatprep.mubr.bf16.mxu0 0
      %969 = vmatmul.mubr.bf16.gmra.mrb[0].mxu0 %v931
      %v970 = vpop.f32.mrb[0].mxu0
      %v971 = vadd.f32 0.0, %v970
      %v972 = vpop.f32.mrb[0].mxu0
      %v973 = vpop.f32.mrb[0].mxu0
      %v974 = vadd.f32 0.0, %v973
      %v975 = vpop.f32.mrb[0].mxu0
      %976 = vmatprep.mubr.bf16.mxu0 0
      %977 = vmatmul.mubr.bf16.gmra.mrb[0].mxu0 %v934
      %v978 = vpop.f32.mrb[0].mxu0
      %v979 = vadd.f32 0.0, %v978
      %v980 = vpop.f32.mrb[0].mxu0
      %v981 = vpop.f32.mrb[0].mxu0
      %v982 = vadd.f32 0.0, %v981
      %v983 = vpop.f32.mrb[0].mxu0
      %984 = vdwg.mxu0
      %v985 = vmax.f32 %v911, %v971
      %v986 = vmax.f32 %v912, %v974
      %v987 = vmax.f32 %v913, %v979
      %v988 = vmax.f32 %v914, %v982
      %v989 = vld [vmem:[%s3] sm:$0x1]
      %v991 = vlaneseq
      %v992 = vshrl.u32 %v991, 7
      %v993 = vsub.s32 0, %v992
      %v994 = vrot.slane %v989, %v993
      %v996 = vadd.f32 %v985, %v994
      %v997 = vadd.f32 %v986, %v994
      %v998 = vadd.f32 %v987, %v994
      %v999 = vadd.f32 %v988, %v994
      %v1000 = vmax.f32 %v996, 0.0
      %v1001 = vmax.f32 %v997, 0.0
      %v1002 = vmax.f32 %v998, 0.0
      %v1003 = vmax.f32 %v999, 0.0
      %v1004 = vpack.c.bf16 %v1001, %v1000
      %v1005 = vpack.c.bf16 %v1003, %v1002
      %v1006 = vld [vmem:[%s4] sm:$0xf]
      %v1007 = vld [vmem:[%s4 + $0x4] sm:$0xf]
      %v1008 = vld [vmem:[%s5] sm:$0x1]
      %v1010 = vlaneseq
      %v1011 = vshrl.u32 %v1010, 7
      %v1012 = vsub.s32 0, %v1011
      %v1013 = vrot.slane %v1008, %v1012
      %v1017 = vunpack.c.l.b16 %v1006
      %v1018 = vunpack.c.l.b16 %v1007
      %v1019 = vpack.c.b16 %v1018, %v1017
      %vm1021 = vcmask 130048
      %v1023 = vsel %vm1021, %v1004, 0
      %v1026 = vsel %vm1021, %v1005, 0
      %1028 = vmatprep.subr.bf16.mxu0 0
      %1029 = vmatpush1.bf16.msra.mxu0 %v1019
      %1030 = vmatprep.subr.bf16.mxu0 0
      %1031 = vmatpush1.bf16.msra.mxu0 0
      %1032 = vmatprep.subr.bf16.mxu0 0
      %1033 = vmatpush1.bf16.msra.mxu0 0
      %1034 = vmatprep.subr.bf16.mxu0 0
      %1035 = vmatpush1.bf16.msra.mxu0 0
      %1036 = vmatprep.subr.bf16.mxu0 0
      %1037 = vmatpush1.bf16.msra.mxu0 0
      %1038 = vmatprep.subr.bf16.mxu0 0
      %1039 = vmatpush1.bf16.msra.mxu0 0
      %1040 = vmatprep.subr.bf16.mxu0 0
      %1041 = vmatpush1.bf16.msra.mxu0 0
      %1042 = vmatprep.subr.bf16.mxu0 0
      %1043 = vmatpush1.bf16.msra.mxu0 0
      %1044 = vmatprep.subr.bf16.mxu0 0
      %1045 = vmatpush1.bf16.msra.mxu0 0
      %1046 = vmatprep.subr.bf16.mxu0 0
      %1047 = vmatpush1.bf16.msra.mxu0 0
      %1048 = vmatprep.subr.bf16.mxu0 0
      %1049 = vmatpush1.bf16.msra.mxu0 0
      %1050 = vmatprep.subr.bf16.mxu0 0
      %1051 = vmatpush1.bf16.msra.mxu0 0
      %1052 = vmatprep.subr.bf16.mxu0 0
      %1053 = vmatpush1.bf16.msra.mxu0 0
      %1054 = vmatprep.subr.bf16.mxu0 0
      %1055 = vmatpush1.bf16.msra.mxu0 0
      %1056 = vmatprep.subr.bf16.mxu0 0
      %1057 = vmatpush1.bf16.msra.mxu0 0
      %1058 = vmatprep.subr.bf16.mxu0 0
      %1059 = vmatpush1.bf16.msra.mxu0 0
      %1060 = vmatprep.mubr.bf16.mxu0 0
      %1061 = vmatmul.mubr.bf16.gmra.mrb[0].mxu0 %v1023
      %v1062 = vpop.f32.mrb[0].mxu0
      %v1063 = vadd.f32 %v1013, %v1062
      %v1064 = vpop.f32.mrb[0].mxu0
      %v1065 = vpop.f32.mrb[0].mxu0
      %v1066 = vadd.f32 %v1013, %v1065
      %v1067 = vpop.f32.mrb[0].mxu0
      %1068 = vmatprep.mubr.bf16.mxu0 0
      %1069 = vmatmul.mubr.bf16.gmra.mrb[0].mxu0 %v1026
      %v1070 = vpop.f32.mrb[0].mxu0
      %v1071 = vadd.f32 %v1013, %v1070
      %v1072 = vpop.f32.mrb[0].mxu0
      %v1073 = vpop.f32.mrb[0].mxu0
      %v1074 = vadd.f32 %v1013, %v1073
      %v1075 = vpop.f32.mrb[0].mxu0
      %1076 = vdwg.mxu0
      %v1077 = vmax.f32 %v1063, 0.0
      %v1078 = vmax.f32 %v1066, 0.0
      %v1079 = vmax.f32 %v1071, 0.0
      %v1080 = vmax.f32 %v1074, 0.0
      %v1081 = vpack.c.bf16 %v1078, %v1077
      %v1082 = vpack.c.bf16 %v1080, %v1079
      %v1083 = vld [vmem:[%s6] sm:$0xf]
      %v1084 = vld [vmem:[%s6 + $0x4] sm:$0xf]
      %v1085 = vld [vmem:[%s6 + $0x8] sm:$0xf]
      %v1086 = vld [vmem:[%s6 + $0xc] sm:$0xf]
      %v1087 = vld [vmem:[%s6 + $0x10] sm:$0xf]
      %v1088 = vld [vmem:[%s6 + $0x14] sm:$0xf]
      %v1089 = vld [vmem:[%s6 + $0x18] sm:$0xf]
      %v1090 = vld [vmem:[%s6 + $0x1c] sm:$0xf]
      %v1091 = vld [vmem:[%s7] sm:$0x1]
      %v1093 = vlaneseq
      %v1094 = vshrl.u32 %v1093, 7
      %v1095 = vsub.s32 0, %v1094
      %v1096 = vrot.slane %v1091, %v1095
      %v1106 = vunpack.c.l.b16 %v1083
      %v1107 = vunpack.c.l.b16 %v1084
      %v1108 = vunpack.c.l.b16 %v1085
      %v1109 = vunpack.c.l.b16 %v1086
      %v1110 = vunpack.c.l.b16 %v1087
      %v1111 = vunpack.c.l.b16 %v1088
      %v1112 = vunpack.c.l.b16 %v1089
      %v1113 = vunpack.c.l.b16 %v1090
      %v1114 = vpack.c.b16 %v1107, %v1106
      %v1115 = vpack.c.b16 %v1109, %v1108
      %v1116 = vpack.c.b16 %v1111, %v1110
      %v1117 = vpack.c.b16 %v1113, %v1112
      %vm1122 = vcmask 523264
      %v1124 = vsel %vm1122, %v1081, 0
      %v1127 = vsel %vm1122, %v1082, 0
      %1129 = vmatprep.subr.bf16.mxu0 0
      %1130 = vmatpush1.bf16.msra.mxu0 %v1114
      %1131 = vmatprep.subr.bf16.mxu0 0
      %1132 = vmatpush1.bf16.msra.mxu0 %v1115
      %1133 = vmatprep.subr.bf16.mxu0 0
      %1134 = vmatpush1.bf16.msra.mxu0 %v1116
      %1135 = vmatprep.subr.bf16.mxu0 0
      %1136 = vmatpush1.bf16.msra.mxu0 %v1117
      %1137 = vmatprep.subr.bf16.mxu0 0
      %1138 = vmatpush1.bf16.msra.mxu0 0
      %1139 = vmatprep.subr.bf16.mxu0 0
      %1140 = vmatpush1.bf16.msra.mxu0 0
      %1141 = vmatprep.subr.bf16.mxu0 0
      %1142 = vmatpush1.bf16.msra.mxu0 0
      %1143 = vmatprep.subr.bf16.mxu0 0
      %1144 = vmatpush1.bf16.msra.mxu0 0
      %1145 = vmatprep.subr.bf16.mxu0 0
      %1146 = vmatpush1.bf16.msra.mxu0 0
      %1147 = vmatprep.subr.bf16.mxu0 0
      %1148 = vmatpush1.bf16.msra.mxu0 0
      %1149 = vmatprep.subr.bf16.mxu0 0
      %1150 = vmatpush1.bf16.msra.mxu0 0
      %1151 = vmatprep.subr.bf16.mxu0 0
      %1152 = vmatpush1.bf16.msra.mxu0 0
      %1153 = vmatprep.subr.bf16.mxu0 0
      %1154 = vmatpush1.bf16.msra.mxu0 0
      %1155 = vmatprep.subr.bf16.mxu0 0
      %1156 = vmatpush1.bf16.msra.mxu0 0
      %1157 = vmatprep.subr.bf16.mxu0 0
      %1158 = vmatpush1.bf16.msra.mxu0 0
      %1159 = vmatprep.subr.bf16.mxu0 0
      %1160 = vmatpush1.bf16.msra.mxu0 0
      %1161 = vmatprep.mubr.bf16.mxu0 0
      %1162 = vmatmul.mubr.bf16.gmra.mrb[0].mxu0 %v1124
      %v1163 = vpop.f32.mrb[0].mxu0
      %v1164 = vadd.f32 %v1096, %v1163
      %v1165 = vpop.f32.mrb[0].mxu0
      %v1166 = vpop.f32.mrb[0].mxu0
      %v1167 = vadd.f32 %v1096, %v1166
      %v1168 = vpop.f32.mrb[0].mxu0
      %1169 = vmatprep.mubr.bf16.mxu0 0
      %1170 = vmatmul.mubr.bf16.gmra.mrb[0].mxu0 %v1127
      %v1171 = vpop.f32.mrb[0].mxu0
      %v1172 = vadd.f32 %v1096, %v1171
      %v1173 = vpop.f32.mrb[0].mxu0
      %v1174 = vpop.f32.mrb[0].mxu0
      %v1175 = vadd.f32 %v1096, %v1174
      %v1176 = vpop.f32.mrb[0].mxu0
      %1177 = vdwg.mxu0
      %v1178 = vld [vmem:[%s369] sm:$0xff]
      %v1179 = vld [vmem:[%s369 + $0x8] sm:$0xff]
      %v1180 = vld [vmem:[%s369 + $0x10] sm:$0xff]
      %v1181 = vld [vmem:[%s369 + $0x18] sm:$0xff]
      %v1182 = vadd.f32 %v1164, %v1178
      %v1183 = vadd.f32 %v1167, %v1179
      %v1184 = vadd.f32 %v1172, %v1180
      %v1185 = vadd.f32 %v1175, %v1181
      %v1186 = vmax.f32 %v1182, 0.0
      %v1187 = vmax.f32 %v1183, 0.0
      %v1188 = vmax.f32 %v1184, 0.0
      %v1189 = vmax.f32 %v1185, 0.0
      %1190 = vst.msk [vmem:[%s379] sm:$0xff] %vm1021, %v1186
      %1191 = vst.msk [vmem:[%s379 + $0x8] sm:$0xff] %vm1021, %v1187
      %1192 = vst.msk [vmem:[%s379 + $0x10] sm:$0xff] %vm1021, %v1188
      %1193 = vst.msk [vmem:[%s379 + $0x18] sm:$0xff] %vm1021, %v1189
      %s1194 = smul.u32 4, %s24
      %p1195 = scmp.lt.s32.totalorder %s23, 1
      %s1196 = scalar_select %p1195, %s23, 1
      %p1197 = scmp.lt.s32.totalorder %s1194, 3
      %s1198 = scalar_select %p1197, %s1194, 3
      %s1199 = smul.addr %s1196, 4
      %s1200 = sadd.s32 %s1198, %s1199
      %s1201 = smul.addr %s1200, 8
      %s1202 = scalar_lea.vmem %s8, %s1201
      // Predicated region
      $region53: #{invres_mlp_forward.1} parent=51 // pred_check
        %p1203 = pneg %p233
      $region54: #{invres_mlp_forward.1} parent=51 // pred_check_branch
        %1205 = sbr.rel (%p1203) target = $region56
      $region55: #{invres_mlp_forward.1} parent=51 // pred_region
        %s1206 = smul.u32 4, %s24
      $region56: #{invres_mlp_forward.1} parent=51 // pred_fallthru
        _
    $region52: #{invres_mlp_forward.1} parent=5 // pred_fallthru
      _
    %p1207 = scmp.le.s32.totalorder 2, %s14
    // Predicated region
    $region57: #{invres_mlp_forward.1} parent=5 // pred_check
      %p1208 = pneg %p1207
    $region58: #{invres_mlp_forward.1} parent=5 // pred_check_branch
      %1210 = sbr.rel (%p1208) target = $region60
    $region59: #{invres_mlp_forward.1} parent=5 // pred_region
      %s1211 = ssub.s32 %s14, 2
      // Predicated region
      $region61: #{invres_mlp_forward.1} parent=59 // pred_check
        %p1212 = pneg %p239
      $region62: #{invres_mlp_forward.1} parent=59 // pred_check_branch
        %1214 = sbr.rel (%p1212) target = $region64
      $region63: #{invres_mlp_forward.1} parent=59 // pred_region
        %s1215 = smul.u32 4, %s26
        %p1216 = scmp.lt.s32.totalorder %s25, 1
        %s1217 = scalar_select %p1216, %s25, 1
        %p1218 = scmp.lt.s32.totalorder %s1215, 3
        %s1219 = scalar_select %p1218, %s1215, 3
        %s1220 = smul.addr %s1217, 4
        %s1221 = sadd.s32 %s1219, %s1220
        %s1222 = smul.addr %s1221, 8
        %s1223 = scalar_lea.vmem %s8, %s1222
      $region64: #{invres_mlp_forward.1} parent=59 // pred_fallthru
        _
    $region60: #{invres_mlp_forward.1} parent=5 // pred_fallthru
      _
  $region6: #{invres_mlp_forward.1} parent=0 // loop_footer
    %s18 = sadd.s32 1, %s14
  $region7: #{invres_mlp_forward.1} parent=0 // loop_footer_branch
    %13 = sbr.rel target = $region3
  $region8: #{invres_mlp_forward.1} parent=0 // loop_exit
    _

</llo_original>
